<compile_context>
chip_gen: v7x
topology: tpu7x:2x2x1
jax: 0.10.0
libtpu: 0.0.40
codegen_flags: <defaults>
</compile_context>

<pallas_src>
import numpy as np
import jax
import jax.numpy as jnp
from jax.experimental import pallas as pl
from jax.experimental.pallas import tpu as pltpu


def _round_up(x, m):
    return (x + m - 1) // m * m


def _make_kernel(*, seq_len, tile_b, max_fs, filter_sizes, n_filters, nf_pad,
                 compute_dtype):
    """Fused conv-taps + ReLU + masked max-pool + dense head kernel."""
    rows = tile_b * seq_len

    def kernel(emb_ref, wc_ref, bc_ref, wd_ref, bd_ref, out_ref):
        emb = emb_ref[...]                                        # (rows, D)

        # Conv taps: one (rows, D) @ (D, NF_pad) MXU matmul per tap over the
        # merged filter bank; align taps with a sublane rotation.  Wrapped /
        # cross-batch rows only land on positions that are masked below.
        acc = jnp.dot(emb, wc_ref[0], preferred_element_type=jnp.float32)
        for k in range(1, max_fs):
            y = jnp.dot(emb, wc_ref[k], preferred_element_type=jnp.float32)
            acc = acc + pltpu.roll(y, shift=rows - k, axis=0)

        h = jnp.maximum(acc + bc_ref[...], 0.0)                   # (rows, NF_pad)

        # Validity mask built from iota (no captured constants): filter fs only
        # has conv outputs at positions p <= S - fs; padded lanes stay 0.
        pos = jax.lax.broadcasted_iota(jnp.int32, (seq_len, nf_pad), 0)
        col = jax.lax.broadcasted_iota(jnp.int32, (seq_len, nf_pad), 1)
        mask = jnp.zeros((seq_len, nf_pad), jnp.float32)
        for idx, fs in enumerate(filter_sizes):
            in_block = (col >= idx * n_filters) & (col < (idx + 1) * n_filters)
            valid = pos <= (seq_len - fs)
            mask = jnp.where(in_block & valid, 1.0, mask)

        # Masked max-pool over positions (mask-to-0 is safe post-ReLU).
        h = h.reshape(tile_b, seq_len, nf_pad) * mask[None]
        pooled = jnp.max(h, axis=1)                               # (tile_b, NF_pad)

        # ABSA dense head (dropout == identity at inference).
        logits = jnp.dot(pooled.astype(compute_dtype), wd_ref[...],
                         preferred_element_type=jnp.float32) + bd_ref[...]
        out_ref[...] = logits                                     # (tile_b, C_pad)

    return kernel


def prepare_params(params, *, filter_sizes, n_filters, num_categories,
                   output_dim, compute_dtype=jnp.float32):
    """One-time weight prep: fold linear_map into the embedding tables and
    merge / lane-pad the conv + dense weights.  All folds are exact (linear)."""
    d = params["w_map"].shape[1]
    w_map = params["w_map"].astype(jnp.float32)
    b_map = params["b_map"].astype(jnp.float32).reshape(1, d)

    # Concatenation order in the forward is (rhyme, tone, onset).
    tab_rhyme = params["emb_rhyme"] @ w_map[:d] + b_map   # bias folded once
    tab_tone = params["emb_tone"] @ w_map[d:2 * d]
    tab_onset = params["emb_onset"] @ w_map[2 * d:]

    n_fs = len(filter_sizes)
    max_fs = max(filter_sizes)
    nf = n_fs * n_filters
    nf_pad = _round_up(nf, 128)
    c = num_categories * output_dim
    c_pad = _round_up(c, 128)

    wc = np.zeros((max_fs, d, nf_pad), np.float32)
    bc = np.zeros((1, nf_pad), np.float32)
    for idx, fs in enumerate(filter_sizes):
        w = np.asarray(params[f"w_conv{fs}"], np.float32).reshape(fs, d, n_filters)
        wc[:fs, :, idx * n_filters:(idx + 1) * n_filters] = w
        bc[0, idx * n_filters:(idx + 1) * n_filters] = np.asarray(
            params[f"b_conv{fs}"], np.float32).reshape(n_filters)

    wd = np.zeros((nf_pad, c_pad), np.float32)
    bd = np.zeros((1, c_pad), np.float32)
    wd[:nf, :c] = np.asarray(params["w_dense"], np.float32)
    bd[0, :c] = np.asarray(params["b_dense"], np.float32).reshape(c)

    return {
        "tab_rhyme": tab_rhyme, "tab_tone": tab_tone, "tab_onset": tab_onset,
        "wc": jnp.asarray(wc, compute_dtype),
        "bc": jnp.asarray(bc),                       # biases stay f32
        "wd": jnp.asarray(wd, compute_dtype),
        "bd": jnp.asarray(bd),
        "meta": dict(d=d, max_fs=max_fs, n_filters=n_filters,
                     filter_sizes=tuple(filter_sizes),
                     nf_pad=nf_pad, c=c, c_pad=c_pad,
                     num_categories=num_categories, output_dim=output_dim,
                     compute_dtype=compute_dtype),
    }


def textcnn_absa_vipher_forward(x, prep):
    """x: (B, S, 3) int32 indices [onset, tone, rhyme].
    Returns (B, num_categories, output_dim) f32 logits."""
    meta = prep["meta"]
    B, S, _ = x.shape
    d = meta["d"]
    assert S >= meta["max_fs"], "sequence shorter than the largest filter size"

    onset, tone, rhyme = x[..., 0], x[..., 1], x[..., 2]
    # Gathers from the linear_map-folded tables; slab is D wide, not 3D wide.
    emb = (jnp.take(prep["tab_rhyme"], rhyme, axis=0)
           + jnp.take(prep["tab_tone"], tone, axis=0)
           + jnp.take(prep["tab_onset"], onset, axis=0))          # (B, S, D) f32

    # Batch tiling: whole batches per grid step so conv windows and pooling
    # never cross a tile boundary.  ~<=1024 slab rows per step for production B.
    if B <= 8:
        tile_b = B
    else:
        tile_b = min(_round_up(B, 8), max(8, (1024 // S) // 8 * 8))
    b_pad = _round_up(B, tile_b)
    if b_pad != B:
        emb = jnp.pad(emb, ((0, b_pad - B), (0, 0), (0, 0)))

    emb2d = emb.reshape(b_pad * S, d).astype(meta["compute_dtype"])
    rows_tile = tile_b * S
    nf_pad, c_pad, c = meta["nf_pad"], meta["c_pad"], meta["c"]

    kernel = _make_kernel(seq_len=S, tile_b=tile_b, max_fs=meta["max_fs"],
                          filter_sizes=meta["filter_sizes"],
                          n_filters=meta["n_filters"], nf_pad=nf_pad,
                          compute_dtype=meta["compute_dtype"])

    def _full(a):
        nd = a.ndim
        return pl.BlockSpec(a.shape, lambda i, _nd=nd: (0,) * _nd)

    out = pl.pallas_call(
        kernel,
        out_shape=jax.ShapeDtypeStruct((b_pad, c_pad), jnp.float32),
        grid_spec=pltpu.PrefetchScalarGridSpec(
            num_scalar_prefetch=0,
            grid=(b_pad // tile_b,),
            in_specs=[
                pl.BlockSpec((rows_tile, d), lambda i: (i, 0)),   # streamed slab
                _full(prep["wc"]), _full(prep["bc"]),             # resident weights
                _full(prep["wd"]), _full(prep["bd"]),
            ],
            out_specs=pl.BlockSpec((tile_b, c_pad), lambda i: (i, 0)),
        ),
        compiler_params=pltpu.CompilerParams(
            dimension_semantics=("parallel",)),
    )(emb2d, prep["wc"], prep["bc"], prep["wd"], prep["bd"])

    return out[:B, :c].reshape(B, meta["num_categories"], meta["output_dim"])


def reference_forward(x, params, filter_sizes, n_filters,
                      num_categories, output_dim):
    """Pure-JAX reference replicating the PyTorch forward (NCHW conv)."""
    onset, tone, rhyme = x[:, :, 0], x[:, :, 1], x[:, :, 2]
    cat = jnp.concatenate([params["emb_rhyme"][rhyme],
                           params["emb_tone"][tone],
                           params["emb_onset"][onset]], axis=-1)
    emb = cat @ params["w_map"] + params["b_map"][0]
    B, S, D = emb.shape
    emb4 = emb[:, None, :, :]                                  # NCHW (B,1,S,D)
    pooled = []
    for fs in filter_sizes:
        w = params[f"w_conv{fs}"].reshape(fs, D, n_filters)
        w = jnp.transpose(w, (2, 0, 1))[:, None, :, :]         # OIHW (F,1,fs,D)
        conv = jax.lax.conv_general_dilated(
            emb4, w, window_strides=(1, 1), padding="VALID",
            dimension_numbers=("NCHW", "OIHW", "NCHW"))        # (B,F,L,1)
        conv = conv + params[f"b_conv{fs}"][0][None, :, None, None]
        conv = jax.nn.relu(conv)[..., 0]                       # (B,F,L)
        pooled.append(jnp.max(conv, axis=2))                   # (B,F)
    feat = jnp.concatenate(pooled, axis=1)
    out = feat @ params["w_dense"] + params["b_dense"][0]
    return out.reshape(B, num_categories, output_dim)


if __name__ == "__main__":
    # small config consistent with the module
    B, S, D = 2, 8, 32
    n_filters = 8
    filter_sizes = (2, 3, 4)
    output_dim = 3          # num_output (labels per category)
    num_categories = 4
    pad_idx = 0
    vocab_sizes = {"rhyme": 50, "tone": 12, "onset": 30}

    key = jax.random.PRNGKey(0)
    keys = jax.random.split(key, 16)

    def emb_table(k, n):
        t = 0.1 * jax.random.normal(k, (n, D), jnp.float32)
        return t.at[pad_idx].set(0.0)   # padding_idx row is zero

    params = {
        "emb_rhyme": emb_table(keys[0], vocab_sizes["rhyme"]),
        "emb_tone": emb_table(keys[1], vocab_sizes["tone"]),
        "emb_onset": emb_table(keys[2], vocab_sizes["onset"]),
        "w_map": 0.05 * jax.random.normal(keys[3], (3 * D, D), jnp.float32),
        "b_map": 0.01 * jax.random.normal(keys[4], (1, D), jnp.float32),
        "w_dense": 0.05 * jax.random.normal(
            keys[5], (len(filter_sizes) * n_filters,
                      output_dim * num_categories), jnp.float32),
        "b_dense": 0.01 * jax.random.normal(
            keys[6], (1, output_dim * num_categories), jnp.float32),
    }
    for i, fs in enumerate(filter_sizes):
        params[f"w_conv{fs}"] = 0.05 * jax.random.normal(
            keys[7 + 2 * i], (fs * D, n_filters), jnp.float32)
        params[f"b_conv{fs}"] = 0.01 * jax.random.normal(
            keys[8 + 2 * i], (1, n_filters), jnp.float32)

    # x[:, :, 0]=onset, x[:, :, 1]=tone, x[:, :, 2]=rhyme
    onset_idx = jax.random.randint(keys[13], (B, S), 0, vocab_sizes["onset"])
    tone_idx = jax.random.randint(keys[14], (B, S), 0, vocab_sizes["tone"])
    rhyme_idx = jax.random.randint(keys[15], (B, S), 0, vocab_sizes["rhyme"])
    x = jnp.stack([onset_idx, tone_idx, rhyme_idx], axis=-1).astype(jnp.int32)

    ref = reference_forward(x, params, filter_sizes, n_filters,
                            num_categories, output_dim)

    # f32 path (tight check vs reference)
    prep_f32 = prepare_params(params, filter_sizes=filter_sizes,
                              n_filters=n_filters,
                              num_categories=num_categories,
                              output_dim=output_dim,
                              compute_dtype=jnp.float32)
    logits = jax.block_until_ready(textcnn_absa_vipher_forward(x, prep_f32))
    assert logits.shape == (B, num_categories, output_dim), logits.shape
    assert jnp.allclose(logits, ref, atol=2e-4, rtol=2e-4), (
        "f32 mismatch vs reference", float(jnp.max(jnp.abs(logits - ref))))

    # bf16 activation/weight path (v6e/v7x optimization), f32 accumulation
    prep_bf16 = prepare_params(params, filter_sizes=filter_sizes,
                               n_filters=n_filters,
                               num_categories=num_categories,
                               output_dim=output_dim,
                               compute_dtype=jnp.bfloat16)
    logits_bf16 = jax.block_until_ready(textcnn_absa_vipher_forward(x, prep_bf16))
    assert jnp.allclose(logits_bf16, ref, atol=2e-2, rtol=2e-2), (
        "bf16 mismatch vs reference",
        float(jnp.max(jnp.abs(logits_bf16 - ref))))

    print("KERNEL_OK")
</pallas_src>

<mosaic_0001>
module attributes {stable_mosaic.version = 11 : i64} {
  func.func @kernel(%arg0: i32, %arg1: memref<16x32xf32, #tpu.memory_space<vmem>>, %arg2: memref<4x32x128xf32, #tpu.memory_space<vmem>>, %arg3: memref<1x128xf32, #tpu.memory_space<vmem>>, %arg4: memref<128x128xf32, #tpu.memory_space<vmem>>, %arg5: memref<1x128xf32, #tpu.memory_space<vmem>>, %arg6: memref<2x128xf32, #tpu.memory_space<vmem>>) attributes {dimension_semantics = [#tpu.dimension_semantics<parallel>], iteration_bounds = array<i64: 1>, scalar_prefetch = 0 : i64, scratch_operands = 0 : i64, tpu.core_type = #tpu.core_type<tc>, window_params = [{transform_indices = @transform_0, window_bounds = array<i64: 16, 32>}, {pipeline_mode = #tpu.pipeline_mode<synchronous>, transform_indices = @transform_1, window_bounds = array<i64: 4, 32, 128>}, {pipeline_mode = #tpu.pipeline_mode<synchronous>, transform_indices = @transform_2, window_bounds = array<i64: 1, 128>}, {pipeline_mode = #tpu.pipeline_mode<synchronous>, transform_indices = @transform_3, window_bounds = array<i64: 128, 128>}, {pipeline_mode = #tpu.pipeline_mode<synchronous>, transform_indices = @transform_4, window_bounds = array<i64: 1, 128>}, {transform_indices = @transform_5, window_bounds = array<i64: 2, 128>}]} {
    %c0 = arith.constant 0 : index
    %c0_0 = arith.constant 0 : index
    %0 = vector.load %arg1[%c0, %c0_0] : memref<16x32xf32, #tpu.memory_space<vmem>>, vector<16x32xf32>
    %c0_1 = arith.constant 0 : index
    %c0_2 = arith.constant 0 : index
    %c0_3 = arith.constant 0 : index
    %1 = vector.load %arg2[%c0_1, %c0_2, %c0_3] : memref<4x32x128xf32, #tpu.memory_space<vmem>>, vector<1x32x128xf32>
    %2 = vector.shape_cast %1 : vector<1x32x128xf32> to vector<32x128xf32>
    %cst = arith.constant dense<0.000000e+00> : vector<16x128xf32>
    %3 = tpu.matmul %0, %2, %cst {dimension_numbers = #tpu.dot_dimension_numbers<[1], [0], [0], [1], [0, 0, 1, 1], [], []>} : vector<16x32xf32>, vector<32x128xf32>, vector<16x128xf32> -> vector<16x128xf32>
    %c1 = arith.constant 1 : index
    %c0_4 = arith.constant 0 : index
    %c0_5 = arith.constant 0 : index
    %4 = vector.load %arg2[%c1, %c0_4, %c0_5] : memref<4x32x128xf32, #tpu.memory_space<vmem>>, vector<1x32x128xf32>
    %5 = vector.shape_cast %4 : vector<1x32x128xf32> to vector<32x128xf32>
    %cst_6 = arith.constant dense<0.000000e+00> : vector<16x128xf32>
    %6 = tpu.matmul %0, %5, %cst_6 {dimension_numbers = #tpu.dot_dimension_numbers<[1], [0], [0], [1], [0, 0, 1, 1], [], []>} : vector<16x32xf32>, vector<32x128xf32>, vector<16x128xf32> -> vector<16x128xf32>
    %c15_i32 = arith.constant 15 : i32
    %7 = tpu.dynamic_rotate %6 by %c15_i32 dim 0 : vector<16x128xf32>, i32 -> vector<16x128xf32>
    %8 = arith.addf %3, %7 : vector<16x128xf32>
    %c2 = arith.constant 2 : index
    %c0_7 = arith.constant 0 : index
    %c0_8 = arith.constant 0 : index
    %9 = vector.load %arg2[%c2, %c0_7, %c0_8] : memref<4x32x128xf32, #tpu.memory_space<vmem>>, vector<1x32x128xf32>
    %10 = vector.shape_cast %9 : vector<1x32x128xf32> to vector<32x128xf32>
    %cst_9 = arith.constant dense<0.000000e+00> : vector<16x128xf32>
    %11 = tpu.matmul %0, %10, %cst_9 {dimension_numbers = #tpu.dot_dimension_numbers<[1], [0], [0], [1], [0, 0, 1, 1], [], []>} : vector<16x32xf32>, vector<32x128xf32>, vector<16x128xf32> -> vector<16x128xf32>
    %c14_i32 = arith.constant 14 : i32
    %12 = tpu.dynamic_rotate %11 by %c14_i32 dim 0 : vector<16x128xf32>, i32 -> vector<16x128xf32>
    %13 = arith.addf %8, %12 : vector<16x128xf32>
    %c3 = arith.constant 3 : index
    %c0_10 = arith.constant 0 : index
    %c0_11 = arith.constant 0 : index
    %14 = vector.load %arg2[%c3, %c0_10, %c0_11] : memref<4x32x128xf32, #tpu.memory_space<vmem>>, vector<1x32x128xf32>
    %15 = vector.shape_cast %14 : vector<1x32x128xf32> to vector<32x128xf32>
    %cst_12 = arith.constant dense<0.000000e+00> : vector<16x128xf32>
    %16 = tpu.matmul %0, %15, %cst_12 {dimension_numbers = #tpu.dot_dimension_numbers<[1], [0], [0], [1], [0, 0, 1, 1], [], []>} : vector<16x32xf32>, vector<32x128xf32>, vector<16x128xf32> -> vector<16x128xf32>
    %c13_i32 = arith.constant 13 : i32
    %17 = tpu.dynamic_rotate %16 by %c13_i32 dim 0 : vector<16x128xf32>, i32 -> vector<16x128xf32>
    %18 = arith.addf %13, %17 : vector<16x128xf32>
    %c0_13 = arith.constant 0 : index
    %c0_14 = arith.constant 0 : index
    %19 = vector.load %arg3[%c0_13, %c0_14] : memref<1x128xf32, #tpu.memory_space<vmem>>, vector<1x128xf32>
    %20 = vector.broadcast %19 : vector<1x128xf32> to vector<16x128xf32>
    %21 = arith.addf %18, %20 : vector<16x128xf32>
    %cst_15 = arith.constant 0.000000e+00 : f32
    %22 = vector.broadcast %cst_15 : f32 to vector<16x128xf32>
    %23 = arith.maximumf %21, %22 : vector<16x128xf32>
    %24 = tpu.iota {dimensions = array<i32: 0>} : vector<8x128xi32>
    %25 = tpu.iota {dimensions = array<i32: 1>} : vector<8x128xi32>
    %cst_16 = arith.constant 0.000000e+00 : f32
    %26 = vector.broadcast %cst_16 : f32 to vector<8x128xf32>
    %c0_i32 = arith.constant 0 : i32
    %27 = vector.broadcast %c0_i32 : i32 to vector<8x128xi32>
    %28 = arith.cmpi sge, %25, %27 : vector<8x128xi32>
    %c8_i32 = arith.constant 8 : i32
    %29 = vector.broadcast %c8_i32 : i32 to vector<8x128xi32>
    %30 = arith.cmpi slt, %25, %29 : vector<8x128xi32>
    %31 = arith.andi %28, %30 : vector<8x128xi1>
    %c6_i32 = arith.constant 6 : i32
    %32 = vector.broadcast %c6_i32 : i32 to vector<8x128xi32>
    %33 = arith.cmpi sle, %24, %32 : vector<8x128xi32>
    %34 = arith.andi %31, %33 : vector<8x128xi1>
    %cst_17 = arith.constant 1.000000e+00 : f32
    %35 = vector.broadcast %cst_17 : f32 to vector<8x128xf32>
    %36 = arith.select %34, %35, %26 : vector<8x128xi1>, vector<8x128xf32>
    %c8_i32_18 = arith.constant 8 : i32
    %37 = vector.broadcast %c8_i32_18 : i32 to vector<8x128xi32>
    %38 = arith.cmpi sge, %25, %37 : vector<8x128xi32>
    %c16_i32 = arith.constant 16 : i32
    %39 = vector.broadcast %c16_i32 : i32 to vector<8x128xi32>
    %40 = arith.cmpi slt, %25, %39 : vector<8x128xi32>
    %41 = arith.andi %38, %40 : vector<8x128xi1>
    %c5_i32 = arith.constant 5 : i32
    %42 = vector.broadcast %c5_i32 : i32 to vector<8x128xi32>
    %43 = arith.cmpi sle, %24, %42 : vector<8x128xi32>
    %44 = arith.andi %41, %43 : vector<8x128xi1>
    %cst_19 = arith.constant 1.000000e+00 : f32
    %45 = vector.broadcast %cst_19 : f32 to vector<8x128xf32>
    %46 = arith.select %44, %45, %36 : vector<8x128xi1>, vector<8x128xf32>
    %c16_i32_20 = arith.constant 16 : i32
    %47 = vector.broadcast %c16_i32_20 : i32 to vector<8x128xi32>
    %48 = arith.cmpi sge, %25, %47 : vector<8x128xi32>
    %c24_i32 = arith.constant 24 : i32
    %49 = vector.broadcast %c24_i32 : i32 to vector<8x128xi32>
    %50 = arith.cmpi slt, %25, %49 : vector<8x128xi32>
    %51 = arith.andi %48, %50 : vector<8x128xi1>
    %c4_i32 = arith.constant 4 : i32
    %52 = vector.broadcast %c4_i32 : i32 to vector<8x128xi32>
    %53 = arith.cmpi sle, %24, %52 : vector<8x128xi32>
    %54 = arith.andi %51, %53 : vector<8x128xi1>
    %cst_21 = arith.constant 1.000000e+00 : f32
    %55 = vector.broadcast %cst_21 : f32 to vector<8x128xf32>
    %56 = arith.select %54, %55, %46 : vector<8x128xi1>, vector<8x128xf32>
    %57 = vector.shape_cast %23 : vector<16x128xf32> to vector<2x8x128xf32>
    %58 = vector.shape_cast %56 : vector<8x128xf32> to vector<1x8x128xf32>
    %59 = vector.broadcast %58 : vector<1x8x128xf32> to vector<2x8x128xf32>
    %60 = arith.mulf %57, %59 : vector<2x8x128xf32>
    %cst_22 = arith.constant dense<0xFF800000> : vector<2x128xf32>
    %61 = vector.multi_reduction <maximumf>, %60, %cst_22 [1] : vector<2x8x128xf32> to vector<2x128xf32>
    %c0_23 = arith.constant 0 : index
    %c0_24 = arith.constant 0 : index
    %62 = vector.load %arg4[%c0_23, %c0_24] : memref<128x128xf32, #tpu.memory_space<vmem>>, vector<128x128xf32>
    %cst_25 = arith.constant dense<0.000000e+00> : vector<2x128xf32>
    %63 = tpu.matmul %61, %62, %cst_25 {dimension_numbers = #tpu.dot_dimension_numbers<[1], [0], [0], [1], [0, 0, 1, 1], [], []>} : vector<2x128xf32>, vector<128x128xf32>, vector<2x128xf32> -> vector<2x128xf32>
    %c0_26 = arith.constant 0 : index
    %c0_27 = arith.constant 0 : index
    %64 = vector.load %arg5[%c0_26, %c0_27] : memref<1x128xf32, #tpu.memory_space<vmem>>, vector<1x128xf32>
    %65 = vector.broadcast %64 : vector<1x128xf32> to vector<2x128xf32>
    %66 = arith.addf %63, %65 : vector<2x128xf32>
    %c0_28 = arith.constant 0 : index
    %c0_29 = arith.constant 0 : index
    %67 = vector.load %arg6[%c0_28, %c0_29] : memref<2x128xf32, #tpu.memory_space<vmem>>, vector<2x128xf32>
    tpu.vector_store %arg6[%c0_28, %c0_29], %66 {strides = array<i32>} : memref<2x128xf32, #tpu.memory_space<vmem>>, vector<2x128xf32>,
    return
  }
  func.func @transform_0(%arg0: i32) -> (i32, i32) {
    %c0_i32 = arith.constant 0 : i32
    %c0_i32_0 = arith.constant 0 : i32
    return %arg0, %c0_i32 : i32, i32
  }
  func.func @transform_1(%arg0: i32) -> (i32, i32, i32) {
    %c0_i32 = arith.constant 0 : i32
    %c0_i32_0 = arith.constant 0 : i32
    %c0_i32_1 = arith.constant 0 : i32
    %c0_i32_2 = arith.constant 0 : i32
    return %c0_i32, %c0_i32_0, %c0_i32_1 : i32, i32, i32
  }
  func.func @transform_2(%arg0: i32) -> (i32, i32) {
    %c0_i32 = arith.constant 0 : i32
    %c0_i32_0 = arith.constant 0 : i32
    %c0_i32_1 = arith.constant 0 : i32
    return %c0_i32, %c0_i32_0 : i32, i32
  }
  func.func @transform_3(%arg0: i32) -> (i32, i32) {
    %c0_i32 = arith.constant 0 : i32
    %c0_i32_0 = arith.constant 0 : i32
    %c0_i32_1 = arith.constant 0 : i32
    return %c0_i32, %c0_i32_0 : i32, i32
  }
  func.func @transform_4(%arg0: i32) -> (i32, i32) {
    %c0_i32 = arith.constant 0 : i32
    %c0_i32_0 = arith.constant 0 : i32
    %c0_i32_1 = arith.constant 0 : i32
    return %c0_i32, %c0_i32_0 : i32, i32
  }
  func.func @transform_5(%arg0: i32) -> (i32, i32) {
    %c0_i32 = arith.constant 0 : i32
    %c0_i32_0 = arith.constant 0 : i32
    return %arg0, %c0_i32 : i32, i32
  }
}

</mosaic_0001>

<llo_original>
// kernel: tpu_custom_call.1
$region0: #{tpu_custom_call.1}
  #allocation0 [shape = 'u32[]', space=smem, size = 0x4, offset = 0x4, fixed_abs, tag = 'smem constant byte address 0x4 - core index']
  #allocation1 [shape = 'u32[144,128]{1,0:T(1,128)}', space=vmem, size = 0x12000, scoped, tag = 'internal scratch']
  %s0 = inlined_call_operand.hbm [shape: f32[16,32], index: 0, kind: input, shape index: {}]
  %s1 = inlined_call_operand.hbm [shape: f32[4,32,128], index: 1, kind: input, shape index: {}]
  %s2 = inlined_call_operand.vmem [shape: f32[1,128], index: 2, kind: input, shape index: {}]
  %s3 = inlined_call_operand.hbm [shape: f32[128,128], index: 3, kind: input, shape index: {}]
  %s4 = inlined_call_operand.vmem [shape: f32[1,128], index: 4, kind: input, shape index: {}]
  %s5 = inlined_call_operand.hbm [shape: f32[2,128], index: 5, kind: output, shape index: {}]
  %s6 = sld [smem:[#allocation0]]
  $region42: #{tpu_custom_call.1} parent=0
    _
  %s8 = ssub.s32 1, %s6
  %s9 = scalar_select 0, %s8, %s6
  $region1: #{tpu_custom_call.1} parent=0
    #allocation2 [shape = 'u8[8192]{0}', space=vmem, size = 0x2000, scoped, tag = 'input window, operand 0, single buffered']
    #allocation3 [shape = 's32[1]{0}', space=sflag, size = 0x4, scoped, tag = 'scoped memory for tpu_custom_call.1']
    #allocation4 [shape = 's32[1]{0}', space=sflag, size = 0x4, scoped, tag = 'scoped memory for tpu_custom_call.1']
    #allocation5 [shape = 'u8[65536]{0}', space=vmem, size = 0x10000, scoped, tag = 'input window, operand 1, single buffered']
    #allocation6 [shape = 's32[1]{0}', space=sflag, size = 0x4, scoped, tag = 'scoped memory for tpu_custom_call.1']
    #allocation7 [shape = 'u8[65536]{0}', space=vmem, size = 0x10000, scoped, tag = 'input window, operand 3, single buffered']
    #allocation8 [shape = 'u8[1024]{0}', space=vmem, size = 0x400, scoped, tag = 'output window, operand 0, single buffered']
    %10 = vsyncpa [#allocation3], 0
    %11 = vsyncpa [#allocation6], 0
    %12 = vsyncpa [#allocation4], 0
    // Predicated region
    $region2: #{tpu_custom_call.1} parent=1 // pred_check
      _
    $region3: #{tpu_custom_call.1} parent=1 // pred_check_branch
      %14 = sbr.rel (0) target = $region5
    $region4: #{tpu_custom_call.1} parent=1 // pred_region
      %s16 = ssub.s32 256, 256
      %17 = vsyncadd [#allocation3], %s16
      %s18 = sshll.u32 [#allocation2], 4
      %s19 = int_to_ptr.vmem [resolvable:$true] %s18
      %24 = dma.hbm_to_vmem [thread:$0]  %s0, 256, %s19, [#allocation3], 128, 128, 8
    $region5: #{tpu_custom_call.1} parent=1 // pred_fallthru
      _
    // Predicated region
    $region6: #{tpu_custom_call.1} parent=1 // pred_check
      _
    $region7: #{tpu_custom_call.1} parent=1 // pred_check_branch
      %26 = sbr.rel (0) target = $region9
    $region8: #{tpu_custom_call.1} parent=1 // pred_region
      %s28 = ssub.s32 2048, 2048
      %29 = vsyncadd [#allocation6], %s28
      %s30 = sshll.u32 [#allocation5], 4
      %s31 = int_to_ptr.vmem [resolvable:$true] %s30
      %36 = dma.hbm_to_vmem [thread:$0]  %s1, 2048, %s31, [#allocation6], 128, 128, 8
    $region9: #{tpu_custom_call.1} parent=1 // pred_fallthru
      _
    // Predicated region
    $region10: #{tpu_custom_call.1} parent=1 // pred_check
      _
    $region11: #{tpu_custom_call.1} parent=1 // pred_check_branch
      %38 = sbr.rel (0) target = $region13
    $region12: #{tpu_custom_call.1} parent=1 // pred_region
      _
    $region13: #{tpu_custom_call.1} parent=1 // pred_fallthru
      _
    // Predicated region
    $region14: #{tpu_custom_call.1} parent=1 // pred_check
      _
    $region15: #{tpu_custom_call.1} parent=1 // pred_check_branch
      %40 = sbr.rel (0) target = $region17
    $region16: #{tpu_custom_call.1} parent=1 // pred_region
      %s42 = ssub.s32 2048, 2048
      %43 = vsyncadd [#allocation6], %s42
      %s44 = sshll.u32 [#allocation7], 4
      %s45 = int_to_ptr.vmem [resolvable:$true] %s44
      %50 = dma.hbm_to_vmem [thread:$0]  %s3, 2048, %s45, [#allocation6], 128, 128, 8
    $region17: #{tpu_custom_call.1} parent=1 // pred_fallthru
      _
    // Predicated region
    $region18: #{tpu_custom_call.1} parent=1 // pred_check
      _
    $region19: #{tpu_custom_call.1} parent=1 // pred_check_branch
      %52 = sbr.rel (0) target = $region21
    $region20: #{tpu_custom_call.1} parent=1 // pred_region
      _
    $region21: #{tpu_custom_call.1} parent=1 // pred_fallthru
      _
    // Predicated region
    $region22: #{tpu_custom_call.1} parent=1 // pred_check
      _
    $region23: #{tpu_custom_call.1} parent=1 // pred_check_branch
      %54 = sbr.rel (0) target = $region25
    $region24: #{tpu_custom_call.1} parent=1 // pred_region
      %55 = dma.done [#allocation3], 256
    $region25: #{tpu_custom_call.1} parent=1 // pred_fallthru
      _
    // Predicated region
    $region26: #{tpu_custom_call.1} parent=1 // pred_check
      _
    $region27: #{tpu_custom_call.1} parent=1 // pred_check_branch
      %57 = sbr.rel (0) target = $region29
    $region28: #{tpu_custom_call.1} parent=1 // pred_region
      %58 = dma.done [#allocation6], 2048
    $region29: #{tpu_custom_call.1} parent=1 // pred_fallthru
      _
    // Predicated region
    $region30: #{tpu_custom_call.1} parent=1 // pred_check
      _
    $region31: #{tpu_custom_call.1} parent=1 // pred_check_branch
      %60 = sbr.rel (0) target = $region33
    $region32: #{tpu_custom_call.1} parent=1 // pred_region
      %61 = dma.done [#allocation6], 2048
    $region33: #{tpu_custom_call.1} parent=1 // pred_fallthru
      _
    %v62 = vld [vmem:[#allocation2] sm:$0xff]
    %v63 = vld [vmem:[#allocation2 + $0x8] sm:$0xff]
    %v64 = vld [vmem:[#allocation5] sm:$0xff]
    %v65 = vld [vmem:[#allocation5 + $0x8] sm:$0xff]
    %v66 = vld [vmem:[#allocation5 + $0x10] sm:$0xff]
    %v67 = vld [vmem:[#allocation5 + $0x18] sm:$0xff]
    %s68 = scalar_lea.vmem [#allocation5], 32
    %v69 = vld [vmem:[%s68] sm:$0xff]
    %v70 = vld [vmem:[%s68 + $0x8] sm:$0xff]
    %v71 = vld [vmem:[%s68 + $0x10] sm:$0xff]
    %v72 = vld [vmem:[%s68 + $0x18] sm:$0xff]
    %vm73 = vcmask 261120
    %v75 = vsel %vm73, %v62, 0
    %v78 = vsel %vm73, %v63, 0
    %80 = vmatprep.subr.mxu0 0.0
    %81 = vmatpush1.msra.mxu0 %v69
    %82 = vmatprep.subr.mxu0 0.0
    %83 = vmatpush1.msra.mxu0 %v70
    %84 = vmatprep.subr.mxu0 0.0
    %85 = vmatpush1.msra.mxu0 %v71
    %86 = vmatprep.subr.mxu0 0.0
    %87 = vmatpush1.msra.mxu0 %v72
    %88 = vmatprep.subr.mxu0 0.0
    %89 = vmatpush1.msra.mxu0 0.0
    %90 = vmatprep.subr.mxu0 0.0
    %91 = vmatpush1.msra.mxu0 0.0
    %92 = vmatprep.subr.mxu0 0.0
    %93 = vmatpush1.msra.mxu0 0.0
    %94 = vmatprep.subr.mxu0 0.0
    %95 = vmatpush1.msra.mxu0 0.0
    %96 = vmatprep.subr.mxu0 0.0
    %97 = vmatpush1.msra.mxu0 0.0
    %98 = vmatprep.subr.mxu0 0.0
    %99 = vmatpush1.msra.mxu0 0.0
    %100 = vmatprep.subr.mxu0 0.0
    %101 = vmatpush1.msra.mxu0 0.0
    %102 = vmatprep.subr.mxu0 0.0
    %103 = vmatpush1.msra.mxu0 0.0
    %104 = vmatprep.subr.mxu0 0.0
    %105 = vmatpush1.msra.mxu0 0.0
    %106 = vmatprep.subr.mxu0 0.0
    %107 = vmatpush1.msra.mxu0 0.0
    %108 = vmatprep.subr.mxu0 0.0
    %109 = vmatpush1.msra.mxu0 0.0
    %110 = vmatprep.subr.mxu0 0.0
    %111 = vmatpush1.msra.mxu0 0.0
    %112 = vmatprep.subr.mxu0 0.0
    %113 = vmatpush1.msra.mxu0 0.0
    %114 = vmatprep.subr.mxu0 0.0
    %115 = vmatpush1.msra.mxu0 0.0
    %116 = vmatprep.subr.mxu0 0.0
    %117 = vmatpush1.msra.mxu0 0.0
    %118 = vmatprep.subr.mxu0 0.0
    %119 = vmatpush1.msra.mxu0 0.0
    %120 = vmatprep.subr.mxu0 0.0
    %121 = vmatpush1.msra.mxu0 0.0
    %122 = vmatprep.subr.mxu0 0.0
    %123 = vmatpush1.msra.mxu0 0.0
    %124 = vmatprep.subr.mxu0 0.0
    %125 = vmatpush1.msra.mxu0 0.0
    %126 = vmatprep.subr.mxu0 0.0
    %127 = vmatpush1.msra.mxu0 0.0
    %128 = vmatprep.subr.mxu0 0.0
    %129 = vmatpush1.msra.mxu0 0.0
    %130 = vmatprep.subr.mxu0 0.0
    %131 = vmatpush1.msra.mxu0 0.0
    %132 = vmatprep.subr.mxu0 0.0
    %133 = vmatpush1.msra.mxu0 0.0
    %134 = vmatprep.subr.mxu0 0.0
    %135 = vmatpush1.msra.mxu0 0.0
    %136 = vmatprep.subr.mxu0 0.0
    %137 = vmatpush1.msra.mxu0 0.0
    %138 = vmatprep.subr.mxu0 0.0
    %139 = vmatpush1.msra.mxu0 0.0
    %140 = vmatprep.subr.mxu0 0.0
    %141 = vmatpush1.msra.mxu0 0.0
    %142 = vmatprep.subr.mxu0 0.0
    %143 = vmatpush1.msra.mxu0 0.0
    %144 = vmatprep.mubr.f32.mxu0 0.0
    %145 = vmatmul.mubr.f32.gmra.mrb[0].mxu0 %v75
    %v146 = vpop.f32.mrb[0].mxu0
    %v147 = vadd.f32 0.0, %v146
    %v148 = vpop.f32.mrb[0].mxu0
    %149 = vmatprep.mubr.f32.mxu0 0.0
    %150 = vmatmul.mubr.f32.gmra.mrb[0].mxu0 %v78
    %v151 = vpop.f32.mrb[0].mxu0
    %v152 = vadd.f32 0.0, %v151
    %v153 = vpop.f32.mrb[0].mxu0
    %154 = vdwg.mxu0
    %v155 = vrot.slane %v147, 1
    %v156 = vrot.slane %v152, 1
    %v157 = vlaneseq
    %v158 = vshrl.u32 %v157, 7
    %vm159 = vcmp.lt.s32.totalorder %v158, 7
    %v160 = vsel %vm159, %v155, %v156
    %v161 = vsel %vm159, %v156, %v155
    %162 = vmatprep.subr.mxu0 0.0
    %163 = vmatpush1.msra.mxu0 %v64
    %164 = vmatprep.subr.mxu0 0.0
    %165 = vmatpush1.msra.mxu0 %v65
    %166 = vmatprep.subr.mxu0 0.0
    %167 = vmatpush1.msra.mxu0 %v66
    %168 = vmatprep.subr.mxu0 0.0
    %169 = vmatpush1.msra.mxu0 %v67
    %170 = vmatprep.subr.mxu0 0.0
    %171 = vmatpush1.msra.mxu0 0.0
    %172 = vmatprep.subr.mxu0 0.0
    %173 = vmatpush1.msra.mxu0 0.0
    %174 = vmatprep.subr.mxu0 0.0
    %175 = vmatpush1.msra.mxu0 0.0
    %176 = vmatprep.subr.mxu0 0.0
    %177 = vmatpush1.msra.mxu0 0.0
    %178 = vmatprep.subr.mxu0 0.0
    %179 = vmatpush1.msra.mxu0 0.0
    %180 = vmatprep.subr.mxu0 0.0
    %181 = vmatpush1.msra.mxu0 0.0
    %182 = vmatprep.subr.mxu0 0.0
    %183 = vmatpush1.msra.mxu0 0.0
    %184 = vmatprep.subr.mxu0 0.0
    %185 = vmatpush1.msra.mxu0 0.0
    %186 = vmatprep.subr.mxu0 0.0
    %187 = vmatpush1.msra.mxu0 0.0
    %188 = vmatprep.subr.mxu0 0.0
    %189 = vmatpush1.msra.mxu0 0.0
    %190 = vmatprep.subr.mxu0 0.0
    %191 = vmatpush1.msra.mxu0 0.0
    %192 = vmatprep.subr.mxu0 0.0
    %193 = vmatpush1.msra.mxu0 0.0
    %194 = vmatprep.subr.mxu0 0.0
    %195 = vmatpush1.msra.mxu0 0.0
    %196 = vmatprep.subr.mxu0 0.0
    %197 = vmatpush1.msra.mxu0 0.0
    %198 = vmatprep.subr.mxu0 0.0
    %199 = vmatpush1.msra.mxu0 0.0
    %200 = vmatprep.subr.mxu0 0.0
    %201 = vmatpush1.msra.mxu0 0.0
    %202 = vmatprep.subr.mxu0 0.0
    %203 = vmatpush1.msra.mxu0 0.0
    %204 = vmatprep.subr.mxu0 0.0
    %205 = vmatpush1.msra.mxu0 0.0
    %206 = vmatprep.subr.mxu0 0.0
    %207 = vmatpush1.msra.mxu0 0.0
    %208 = vmatprep.subr.mxu0 0.0
    %209 = vmatpush1.msra.mxu0 0.0
    %210 = vmatprep.subr.mxu0 0.0
    %211 = vmatpush1.msra.mxu0 0.0
    %212 = vmatprep.subr.mxu0 0.0
    %213 = vmatpush1.msra.mxu0 0.0
    %214 = vmatprep.subr.mxu0 0.0
    %215 = vmatpush1.msra.mxu0 0.0
    %216 = vmatprep.subr.mxu0 0.0
    %217 = vmatpush1.msra.mxu0 0.0
    %218 = vmatprep.subr.mxu0 0.0
    %219 = vmatpush1.msra.mxu0 0.0
    %220 = vmatprep.subr.mxu0 0.0
    %221 = vmatpush1.msra.mxu0 0.0
    %222 = vmatprep.subr.mxu0 0.0
    %223 = vmatpush1.msra.mxu0 0.0
    %224 = vmatprep.subr.mxu0 0.0
    %225 = vmatpush1.msra.mxu0 0.0
    %226 = vmatprep.mubr.f32.mxu0 0.0
    %227 = vmatmul.mubr.f32.gmra.mrb[0].mxu0 %v75
    %v228 = vpop.f32.mrb[0].mxu0
    %v229 = vadd.f32 %v160, %v228
    %v230 = vpop.f32.mrb[0].mxu0
    %231 = vmatprep.mubr.f32.mxu0 0.0
    %232 = vmatmul.mubr.f32.gmra.mrb[0].mxu0 %v78
    %v233 = vpop.f32.mrb[0].mxu0
    %v234 = vadd.f32 %v161, %v233
    %v235 = vpop.f32.mrb[0].mxu0
    %236 = vdwg.mxu0
    %s237 = scalar_lea.vmem [#allocation5], 64
    %v238 = vld [vmem:[%s237] sm:$0xff]
    %v239 = vld [vmem:[%s237 + $0x8] sm:$0xff]
    %v240 = vld [vmem:[%s237 + $0x10] sm:$0xff]
    %v241 = vld [vmem:[%s237 + $0x18] sm:$0xff]
    %242 = vmatprep.subr.mxu0 0.0
    %243 = vmatpush1.msra.mxu0 %v238
    %244 = vmatprep.subr.mxu0 0.0
    %245 = vmatpush1.msra.mxu0 %v239
    %246 = vmatprep.subr.mxu0 0.0
    %247 = vmatpush1.msra.mxu0 %v240
    %248 = vmatprep.subr.mxu0 0.0
    %249 = vmatpush1.msra.mxu0 %v241
    %250 = vmatprep.subr.mxu0 0.0
    %251 = vmatpush1.msra.mxu0 0.0
    %252 = vmatprep.subr.mxu0 0.0
    %253 = vmatpush1.msra.mxu0 0.0
    %254 = vmatprep.subr.mxu0 0.0
    %255 = vmatpush1.msra.mxu0 0.0
    %256 = vmatprep.subr.mxu0 0.0
    %257 = vmatpush1.msra.mxu0 0.0
    %258 = vmatprep.subr.mxu0 0.0
    %259 = vmatpush1.msra.mxu0 0.0
    %260 = vmatprep.subr.mxu0 0.0
    %261 = vmatpush1.msra.mxu0 0.0
    %262 = vmatprep.subr.mxu0 0.0
    %263 = vmatpush1.msra.mxu0 0.0
    %264 = vmatprep.subr.mxu0 0.0
    %265 = vmatpush1.msra.mxu0 0.0
    %266 = vmatprep.subr.mxu0 0.0
    %267 = vmatpush1.msra.mxu0 0.0
    %268 = vmatprep.subr.mxu0 0.0
    %269 = vmatpush1.msra.mxu0 0.0
    %270 = vmatprep.subr.mxu0 0.0
    %271 = vmatpush1.msra.mxu0 0.0
    %272 = vmatprep.subr.mxu0 0.0
    %273 = vmatpush1.msra.mxu0 0.0
    %274 = vmatprep.subr.mxu0 0.0
    %275 = vmatpush1.msra.mxu0 0.0
    %276 = vmatprep.subr.mxu0 0.0
    %277 = vmatpush1.msra.mxu0 0.0
    %278 = vmatprep.subr.mxu0 0.0
    %279 = vmatpush1.msra.mxu0 0.0
    %280 = vmatprep.subr.mxu0 0.0
    %281 = vmatpush1.msra.mxu0 0.0
    %282 = vmatprep.subr.mxu0 0.0
    %283 = vmatpush1.msra.mxu0 0.0
    %284 = vmatprep.subr.mxu0 0.0
    %285 = vmatpush1.msra.mxu0 0.0
    %286 = vmatprep.subr.mxu0 0.0
    %287 = vmatpush1.msra.mxu0 0.0
    %288 = vmatprep.subr.mxu0 0.0
    %289 = vmatpush1.msra.mxu0 0.0
    %290 = vmatprep.subr.mxu0 0.0
    %291 = vmatpush1.msra.mxu0 0.0
    %292 = vmatprep.subr.mxu0 0.0
    %293 = vmatpush1.msra.mxu0 0.0
    %294 = vmatprep.subr.mxu0 0.0
    %295 = vmatpush1.msra.mxu0 0.0
    %296 = vmatprep.subr.mxu0 0.0
    %297 = vmatpush1.msra.mxu0 0.0
    %298 = vmatprep.subr.mxu0 0.0
    %299 = vmatpush1.msra.mxu0 0.0
    %300 = vmatprep.subr.mxu0 0.0
    %301 = vmatpush1.msra.mxu0 0.0
    %302 = vmatprep.subr.mxu0 0.0
    %303 = vmatpush1.msra.mxu0 0.0
    %304 = vmatprep.subr.mxu0 0.0
    %305 = vmatpush1.msra.mxu0 0.0
    %306 = vmatprep.mubr.f32.mxu0 0.0
    %307 = vmatmul.mubr.f32.gmra.mrb[0].mxu0 %v75
    %v308 = vpop.f32.mrb[0].mxu0
    %v309 = vadd.f32 0.0, %v308
    %v310 = vpop.f32.mrb[0].mxu0
    %311 = vmatprep.mubr.f32.mxu0 0.0
    %312 = vmatmul.mubr.f32.gmra.mrb[0].mxu0 %v78
    %v313 = vpop.f32.mrb[0].mxu0
    %v314 = vadd.f32 0.0, %v313
    %v315 = vpop.f32.mrb[0].mxu0
    %316 = vdwg.mxu0
    %v317 = vrot.slane %v309, 2
    %v318 = vrot.slane %v314, 2
    %vm319 = vcmp.lt.s32.totalorder %v158, 6
    %v320 = vsel %vm319, %v317, %v318
    %v321 = vsel %vm319, %v318, %v317
    %v322 = vadd.f32 %v229, %v320
    %v323 = vadd.f32 %v234, %v321
    %s324 = scalar_lea.vmem [#allocation5], 96
    %v325 = vld [vmem:[%s324] sm:$0xff]
    %v326 = vld [vmem:[%s324 + $0x8] sm:$0xff]
    %v327 = vld [vmem:[%s324 + $0x10] sm:$0xff]
    %v328 = vld [vmem:[%s324 + $0x18] sm:$0xff]
    %329 = vmatprep.subr.mxu0 0.0
    %330 = vmatpush1.msra.mxu0 %v325
    %331 = vmatprep.subr.mxu0 0.0
    %332 = vmatpush1.msra.mxu0 %v326
    %333 = vmatprep.subr.mxu0 0.0
    %334 = vmatpush1.msra.mxu0 %v327
    %335 = vmatprep.subr.mxu0 0.0
    %336 = vmatpush1.msra.mxu0 %v328
    %337 = vmatprep.subr.mxu0 0.0
    %338 = vmatpush1.msra.mxu0 0.0
    %339 = vmatprep.subr.mxu0 0.0
    %340 = vmatpush1.msra.mxu0 0.0
    %341 = vmatprep.subr.mxu0 0.0
    %342 = vmatpush1.msra.mxu0 0.0
    %343 = vmatprep.subr.mxu0 0.0
    %344 = vmatpush1.msra.mxu0 0.0
    %345 = vmatprep.subr.mxu0 0.0
    %346 = vmatpush1.msra.mxu0 0.0
    %347 = vmatprep.subr.mxu0 0.0
    %348 = vmatpush1.msra.mxu0 0.0
    %349 = vmatprep.subr.mxu0 0.0
    %350 = vmatpush1.msra.mxu0 0.0
    %351 = vmatprep.subr.mxu0 0.0
    %352 = vmatpush1.msra.mxu0 0.0
    %353 = vmatprep.subr.mxu0 0.0
    %354 = vmatpush1.msra.mxu0 0.0
    %355 = vmatprep.subr.mxu0 0.0
    %356 = vmatpush1.msra.mxu0 0.0
    %357 = vmatprep.subr.mxu0 0.0
    %358 = vmatpush1.msra.mxu0 0.0
    %359 = vmatprep.subr.mxu0 0.0
    %360 = vmatpush1.msra.mxu0 0.0
    %361 = vmatprep.subr.mxu0 0.0
    %362 = vmatpush1.msra.mxu0 0.0
    %363 = vmatprep.subr.mxu0 0.0
    %364 = vmatpush1.msra.mxu0 0.0
    %365 = vmatprep.subr.mxu0 0.0
    %366 = vmatpush1.msra.mxu0 0.0
    %367 = vmatprep.subr.mxu0 0.0
    %368 = vmatpush1.msra.mxu0 0.0
    %369 = vmatprep.subr.mxu0 0.0
    %370 = vmatpush1.msra.mxu0 0.0
    %371 = vmatprep.subr.mxu0 0.0
    %372 = vmatpush1.msra.mxu0 0.0
    %373 = vmatprep.subr.mxu0 0.0
    %374 = vmatpush1.msra.mxu0 0.0
    %375 = vmatprep.subr.mxu0 0.0
    %376 = vmatpush1.msra.mxu0 0.0
    %377 = vmatprep.subr.mxu0 0.0
    %378 = vmatpush1.msra.mxu0 0.0
    %379 = vmatprep.subr.mxu0 0.0
    %380 = vmatpush1.msra.mxu0 0.0
    %381 = vmatprep.subr.mxu0 0.0
    %382 = vmatpush1.msra.mxu0 0.0
    %383 = vmatprep.subr.mxu0 0.0
    %384 = vmatpush1.msra.mxu0 0.0
    %385 = vmatprep.subr.mxu0 0.0
    %386 = vmatpush1.msra.mxu0 0.0
    %387 = vmatprep.subr.mxu0 0.0
    %388 = vmatpush1.msra.mxu0 0.0
    %389 = vmatprep.subr.mxu0 0.0
    %390 = vmatpush1.msra.mxu0 0.0
    %391 = vmatprep.subr.mxu0 0.0
    %392 = vmatpush1.msra.mxu0 0.0
    %393 = vmatprep.mubr.f32.mxu0 0.0
    %394 = vmatmul.mubr.f32.gmra.mrb[0].mxu0 %v75
    %v395 = vpop.f32.mrb[0].mxu0
    %v396 = vadd.f32 0.0, %v395
    %v397 = vpop.f32.mrb[0].mxu0
    %398 = vmatprep.mubr.f32.mxu0 0.0
    %399 = vmatmul.mubr.f32.gmra.mrb[0].mxu0 %v78
    %v400 = vpop.f32.mrb[0].mxu0
    %v401 = vadd.f32 0.0, %v400
    %v402 = vpop.f32.mrb[0].mxu0
    %403 = vdwg.mxu0
    %v404 = vrot.slane %v396, 3
    %v405 = vrot.slane %v401, 3
    %vm406 = vcmp.lt.s32.totalorder %v158, 5
    %v407 = vsel %vm406, %v404, %v405
    %v408 = vsel %vm406, %v405, %v404
    %v409 = vadd.f32 %v322, %v407
    %v410 = vadd.f32 %v323, %v408
    %v411 = vld [vmem:[%s2] sm:$0x1]
    %v413 = vlaneseq
    %v414 = vshrl.u32 %v413, 7
    %v415 = vsub.s32 0, %v414
    %v416 = vrot.slane %v411, %v415
    %v418 = vadd.f32 %v409, %v416
    %v419 = vadd.f32 %v410, %v416
    %v420 = vmax.f32 %v418, 0.0
    %v421 = vmax.f32 %v419, 0.0
    %v422 = vlaneseq
    %v423 = vand.u32 %v422, 127
    %vm424 = vcmp.ge.s32.totalorder %v423, 0
    %vm425 = vcmp.lt.s32.totalorder %v423, 8
    %vm426 = vmand %vm424, %vm425
    %vm427 = vcmp.le.s32.totalorder %v158, 6
    %vm428 = vmand %vm426, %vm427
    %v429 = vsel %vm428, 1.0, 0.0
    %vm430 = vcmp.ge.s32.totalorder %v423, 8
    %vm431 = vcmp.lt.s32.totalorder %v423, 16
    %vm432 = vmand %vm430, %vm431
    %vm433 = vcmp.le.s32.totalorder %v158, 5
    %vm434 = vmand %vm432, %vm433
    %v435 = vsel %vm434, 1.0, %v429
    %vm436 = vcmp.ge.s32.totalorder %v423, 16
    %vm437 = vcmp.lt.s32.totalorder %v423, 24
    %vm438 = vmand %vm436, %vm437
    %vm439 = vcmp.le.s32.totalorder %v158, 4
    %vm440 = vmand %vm438, %vm439
    %v441 = vsel %vm440, 1.0, %v435
    %v442 = vmul.f32 %v420, %v441
    %v443 = vmul.f32 %v421, %v441
    %v444 = vrot.slane %v442, 4
    %v445 = vmax.f32 %v442, %v444
    %v446 = vrot.slane %v445, 2
    %v447 = vmax.f32 %v445, %v446
    %v448 = vrot.slane %v447, 1
    %v449 = vmax.f32 %v447, %v448
    %v450 = vrot.slane %v443, 4
    %v451 = vmax.f32 %v443, %v450
    %v452 = vrot.slane %v451, 2
    %v453 = vmax.f32 %v451, %v452
    %v454 = vrot.slane %v453, 1
    %v455 = vmax.f32 %v453, %v454
    %v456 = vld [vmem:[#allocation7] sm:$0xff]
    %v457 = vld [vmem:[#allocation7 + $0x8] sm:$0xff]
    %v458 = vld [vmem:[#allocation7 + $0x10] sm:$0xff]
    %v459 = vld [vmem:[#allocation7 + $0x18] sm:$0xff]
    %v460 = vld [vmem:[#allocation7 + $0x20] sm:$0xff]
    %v461 = vld [vmem:[#allocation7 + $0x28] sm:$0xff]
    %v462 = vld [vmem:[#allocation7 + $0x30] sm:$0xff]
    %v463 = vld [vmem:[#allocation7 + $0x38] sm:$0xff]
    %v464 = vld [vmem:[#allocation7 + $0x40] sm:$0xff]
    %v465 = vld [vmem:[#allocation7 + $0x48] sm:$0xff]
    %v466 = vld [vmem:[#allocation7 + $0x50] sm:$0xff]
    %v467 = vld [vmem:[#allocation7 + $0x58] sm:$0xff]
    %v468 = vld [vmem:[#allocation7 + $0x60] sm:$0xff]
    %v469 = vld [vmem:[#allocation7 + $0x68] sm:$0xff]
    %v470 = vld [vmem:[#allocation7 + $0x70] sm:$0xff]
    %v471 = vld [vmem:[#allocation7 + $0x78] sm:$0xff]
    %v472 = vld [vmem:[%s4] sm:$0x1]
    %v474 = vlaneseq
    %v475 = vshrl.u32 %v474, 7
    %v476 = vsub.s32 0, %v475
    %v477 = vrot.slane %v472, %v476
    %vm481 = vcmask 1041409
    %v482 = vsel %vm481, %v455, %v449
    %484 = vmatprep.subr.mxu0 0.0
    %485 = vmatpush1.msra.mxu0 %v456
    %486 = vmatprep.subr.mxu0 0.0
    %487 = vmatpush1.msra.mxu0 %v457
    %488 = vmatprep.subr.mxu0 0.0
    %489 = vmatpush1.msra.mxu0 %v458
    %490 = vmatprep.subr.mxu0 0.0
    %491 = vmatpush1.msra.mxu0 %v459
    %492 = vmatprep.subr.mxu0 0.0
    %493 = vmatpush1.msra.mxu0 %v460
    %494 = vmatprep.subr.mxu0 0.0
    %495 = vmatpush1.msra.mxu0 %v461
    %496 = vmatprep.subr.mxu0 0.0
    %497 = vmatpush1.msra.mxu0 %v462
    %498 = vmatprep.subr.mxu0 0.0
    %499 = vmatpush1.msra.mxu0 %v463
    %500 = vmatprep.subr.mxu0 0.0
    %501 = vmatpush1.msra.mxu0 %v464
    %502 = vmatprep.subr.mxu0 0.0
    %503 = vmatpush1.msra.mxu0 %v465
    %504 = vmatprep.subr.mxu0 0.0
    %505 = vmatpush1.msra.mxu0 %v466
    %506 = vmatprep.subr.mxu0 0.0
    %507 = vmatpush1.msra.mxu0 %v467
    %508 = vmatprep.subr.mxu0 0.0
    %509 = vmatpush1.msra.mxu0 %v468
    %510 = vmatprep.subr.mxu0 0.0
    %511 = vmatpush1.msra.mxu0 %v469
    %512 = vmatprep.subr.mxu0 0.0
    %513 = vmatpush1.msra.mxu0 %v470
    %514 = vmatprep.subr.mxu0 0.0
    %515 = vmatpush1.msra.mxu0 %v471
    %516 = vmatprep.subr.mxu0 0.0
    %517 = vmatpush1.msra.mxu0 0.0
    %518 = vmatprep.subr.mxu0 0.0
    %519 = vmatpush1.msra.mxu0 0.0
    %520 = vmatprep.subr.mxu0 0.0
    %521 = vmatpush1.msra.mxu0 0.0
    %522 = vmatprep.subr.mxu0 0.0
    %523 = vmatpush1.msra.mxu0 0.0
    %524 = vmatprep.subr.mxu0 0.0
    %525 = vmatpush1.msra.mxu0 0.0
    %526 = vmatprep.subr.mxu0 0.0
    %527 = vmatpush1.msra.mxu0 0.0
    %528 = vmatprep.subr.mxu0 0.0
    %529 = vmatpush1.msra.mxu0 0.0
    %530 = vmatprep.subr.mxu0 0.0
    %531 = vmatpush1.msra.mxu0 0.0
    %532 = vmatprep.subr.mxu0 0.0
    %533 = vmatpush1.msra.mxu0 0.0
    %534 = vmatprep.subr.mxu0 0.0
    %535 = vmatpush1.msra.mxu0 0.0
    %536 = vmatprep.subr.mxu0 0.0
    %537 = vmatpush1.msra.mxu0 0.0
    %538 = vmatprep.subr.mxu0 0.0
    %539 = vmatpush1.msra.mxu0 0.0
    %540 = vmatprep.subr.mxu0 0.0
    %541 = vmatpush1.msra.mxu0 0.0
    %542 = vmatprep.subr.mxu0 0.0
    %543 = vmatpush1.msra.mxu0 0.0
    %544 = vmatprep.subr.mxu0 0.0
    %545 = vmatpush1.msra.mxu0 0.0
    %546 = vmatprep.subr.mxu0 0.0
    %547 = vmatpush1.msra.mxu0 0.0
    %548 = vmatprep.mubr.f32.mxu0 0.0
    %549 = vmatmul.mubr.f32.gmra.mrb[0].mxu0 %v482
    %v550 = vpop.f32.mrb[0].mxu0
    %v551 = vadd.f32 %v477, %v550
    %v552 = vpop.f32.mrb[0].mxu0
    %553 = vdwg.mxu0
    %554 = vst [vmem:[#allocation8] sm:$0x3] %v551
    // Predicated region
    $region34: #{tpu_custom_call.1} parent=1 // pred_check
      _
    $region35: #{tpu_custom_call.1} parent=1 // pred_check_branch
      %556 = sbr.rel (0) target = $region37
    $region36: #{tpu_custom_call.1} parent=1 // pred_region
      %s558 = ssub.s32 32, 32
      %559 = vsyncadd [#allocation4], %s558
      %s561 = sshll.u32 [#allocation8], 4
      %s562 = int_to_ptr.vmem [resolvable:$true] %s561
      %564 = dma.vmem_to_hbm [thread:$0]  %s562, 32, %s5, [#allocation4]
    $region37: #{tpu_custom_call.1} parent=1 // pred_fallthru
      _
    // Predicated region
    $region38: #{tpu_custom_call.1} parent=1 // pred_check
      _
    $region39: #{tpu_custom_call.1} parent=1 // pred_check_branch
      %566 = sbr.rel (0) target = $region41
    $region40: #{tpu_custom_call.1} parent=1 // pred_region
      %567 = dma.done [#allocation4], 32
    $region41: #{tpu_custom_call.1} parent=1 // pred_fallthru
      _
    %568 = vsyncpa [#allocation3], 1
    %569 = vsyncpa [#allocation6], 1
    %570 = vsyncpa [#allocation4], 1

</llo_original>
